<compile_context>
chip_gen: v6e
topology: v6e:2x2x1
jax: 0.10.0
libtpu: 0.0.40
codegen_flags: <defaults>
</compile_context>

<pallas_src>
import functools

import jax
import jax.numpy as jnp
from jax.experimental import pallas as pl
from jax.experimental.pallas import tpu as pltpu


_MAX_LANE = 8192
_TARGET_TILE_BYTES = 4 * 1024 * 1024  # ~4 MiB for the larger of the two streams


def _to_dtype_kernel(x_ref, o_ref, *, scale_recip):
    """Elementwise cast (+ optional int->float value scaling) of one tile."""
    x = x_ref[...]
    if scale_recip is not None:
        # int -> float conversion with value scaling (e.g. uint8 * (1/255)),
        # computed in f32 like torchvision's convert_image_dtype.
        # Multiply by a constant reciprocal: one VPU slot op instead of a
        # serial EUP divide chain (differs from x/denom by <= 1 ulp).
        # TODO(synk): optionally compute in bf16 on v6e/v7x when the output is
        # bf16 (micro-opt; kernel is DMA-bound).
        y = x.astype(jnp.float32) * jnp.float32(scale_recip)
        o_ref[...] = y.astype(o_ref.dtype)
    else:
        o_ref[...] = x.astype(o_ref.dtype)


def _xla_convert(x, out_dtype, scale_recip):
    """Plain-XLA fallback for tiny inputs / the <128-element tail."""
    if scale_recip is not None:
        return (x.astype(jnp.float32) * jnp.float32(scale_recip)).astype(out_dtype)
    return x.astype(out_dtype)


def _pick_lane(n):
    """Largest divisor of n that is a multiple of 128 (capped at _MAX_LANE)."""
    cap = min(n, _MAX_LANE)
    cap -= cap % 128
    for lane in range(cap, 127, -128):
        if n % lane == 0:
            return lane
    return None  # n is not a multiple of 128


def to_dtype(image, target=None, *, dtype=jnp.float32, scale=False,
             min_pallas_bytes=256 * 1024):
    """Pallas equivalent of ToDtype.forward(image, target)."""
    out_dtype = jnp.dtype(dtype)
    in_dtype = jnp.dtype(image.dtype)

    in_is_int = jnp.issubdtype(in_dtype, jnp.integer)
    in_is_float = jnp.issubdtype(in_dtype, jnp.floating)
    out_is_float = jnp.issubdtype(out_dtype, jnp.floating)

    scale_recip = None
    if scale:
        if in_is_int and out_is_float:
            # TODO(synk): int32/int64 inputs above 2^24 lose precision in f32
            # relative to a higher-precision reference.
            scale_recip = 1.0 / float(jnp.iinfo(in_dtype).max)
        elif in_is_float and out_is_float:
            scale_recip = None  # convert_image_dtype: float->float is a cast
        else:
            raise NotImplementedError(
                "ToDtype(scale=True) with float->int or int->int conversion "
                "is not implemented (torchvision rescales/rounds here).")

    total = int(image.size)
    in_bytes = total * in_dtype.itemsize
    out_bytes = total * out_dtype.itemsize

    # Tiny-input fast path: Pallas custom-call + grid-step overhead dwarfs the
    # work; let XLA fuse the convert with its producer/consumer.
    if (in_bytes + out_bytes) < min_pallas_bytes:
        return _xla_convert(image, out_dtype, scale_recip), target

    flat = image.reshape(-1)

    # ---- lane-dense slab: (rows, lane), lane | total, lane % 128 == 0 -------
    lane = _pick_lane(total)
    if lane is None:
        # total not a multiple of 128: run Pallas on the 128-aligned prefix,
        # convert the <128-element tail with XLA (no full-slab pad + slice).
        prefix = (total // 128) * 128
        if prefix == 0:
            return _xla_convert(image, out_dtype, scale_recip), target
        head, tail = flat[:prefix], flat[prefix:]
        head_out, _ = to_dtype(head, None, dtype=out_dtype, scale=scale,
                               min_pallas_bytes=0)
        tail_out = _xla_convert(tail, out_dtype, scale_recip)
        out_flat = jnp.concatenate([head_out.reshape(-1), tail_out])
        return out_flat.reshape(image.shape), target

    rows = total // lane
    x2d = flat.reshape(rows, lane)

    # ---- row-tile: larger stream ~4 MiB, but keep a multi-step grid ---------
    bytes_per_row = lane * max(in_dtype.itemsize, out_dtype.itemsize)
    bm = max(32, (_TARGET_TILE_BYTES // bytes_per_row) // 32 * 32)
    if rows > 32:
        # >= ~4 grid steps so the DMA pipeline and (on v7x) both TensorCores
        # engage even for medium (few-MiB) inputs.
        bm = min(bm, max(32, (rows // 4) // 32 * 32))
    if bm >= rows:
        bm = rows  # full extent: no (8,128) divisibility requirement on rows
    grid = (pl.cdiv(rows, bm),)

    # VMEM budget: 2x double-buffered (in + out) tiles + headroom; fits v5e's
    # 16 MiB scoped default and v7x's 32 MiB scoped / 64 MiB physical per core.
    tile_in_bytes = bm * lane * in_dtype.itemsize
    tile_out_bytes = bm * lane * out_dtype.itemsize
    vmem_limit = 2 * (tile_in_bytes + tile_out_bytes) + (4 << 20)
    vmem_limit = max(16 << 20, min(vmem_limit, 32 << 20))

    kernel = functools.partial(_to_dtype_kernel, scale_recip=scale_recip)

    cost = pl.CostEstimate(
        flops=total,              # one convert (+ scale) per element; advisory
        transcendentals=0,
        bytes_accessed=in_bytes + out_bytes,
    )

    # TODO(synk): optional pipeline_mode=pl.Buffered(3) sweep on the larger
    # stream if a profile shows exposed DMA gaps (expect low single-digit %).
    out2d = pl.pallas_call(
        kernel,
        out_shape=jax.ShapeDtypeStruct((rows, lane), out_dtype),
        grid=grid,
        in_specs=[pl.BlockSpec((bm, lane), lambda i: (i, 0))],
        out_specs=pl.BlockSpec((bm, lane), lambda i: (i, 0)),
        compiler_params=pltpu.CompilerParams(
            dimension_semantics=("parallel",),
            vmem_limit_bytes=int(vmem_limit),
        ),
        cost_estimate=cost,
    )(x2d)

    return out2d.reshape(image.shape), target


if __name__ == "__main__":
    key = jax.random.PRNGKey(0)
    # Small NCHW image, uint8 like a raw image tensor (2*4*16*16 = 2048 elems).
    x_u8 = jax.random.randint(key, (2, 4, 16, 16), 0, 256, dtype=jnp.int32).astype(
        jnp.uint8
    )
    target = {"labels": jnp.arange(3, dtype=jnp.int32)}
    ref_scaled = x_u8.astype(jnp.float32) / 255.0

    # Case 1: scale=True, uint8 -> float32 (x * (1/255)); force the Pallas path.
    y_scaled, tgt_out = to_dtype(
        x_u8, target, dtype=jnp.float32, scale=True, min_pallas_bytes=0
    )
    y_scaled = jax.block_until_ready(y_scaled)
    assert y_scaled.shape == x_u8.shape and y_scaled.dtype == jnp.float32
    # multiply-by-reciprocal differs from divide by <= 1 ulp
    assert jnp.allclose(y_scaled, ref_scaled, atol=1e-6)
    assert tgt_out is target  # target passes through untouched

    # Case 2: scale=False, plain cast uint8 -> float32; force the Pallas path.
    y_cast, _ = to_dtype(x_u8, None, dtype=jnp.float32, scale=False,
                         min_pallas_bytes=0)
    y_cast = jax.block_until_ready(y_cast)
    assert jnp.array_equal(y_cast, x_u8.astype(jnp.float32))

    # Case 3: element count not a multiple of 128 -> Pallas prefix + XLA tail.
    key2 = jax.random.PRNGKey(1)
    x_odd = jax.random.randint(key2, (1, 3, 11, 13), 0, 256, dtype=jnp.int32).astype(
        jnp.uint8
    )
    y_odd, _ = to_dtype(x_odd, None, dtype=jnp.float32, scale=True,
                        min_pallas_bytes=0)
    y_odd = jax.block_until_ready(y_odd)
    assert jnp.allclose(y_odd, x_odd.astype(jnp.float32) / 255.0, atol=1e-6)

    # Case 4: tiny-input fast path (default threshold) — plain XLA convert.
    y_small, _ = to_dtype(x_u8, None, dtype=jnp.float32, scale=True)
    y_small = jax.block_until_ready(y_small)
    assert jnp.allclose(y_small, ref_scaled, atol=1e-6)

    # Case 5: unsupported convert_image_dtype paths raise instead of being wrong.
    try:
        to_dtype(x_u8, None, dtype=jnp.uint8, scale=True, min_pallas_bytes=0)
        raise AssertionError("expected NotImplementedError for int->int scaling")
    except NotImplementedError:
        pass

    print("KERNEL_OK")
</pallas_src>

<mosaic_0001>
module attributes {stable_mosaic.version = 11 : i64} {
  func.func @_to_dtype_kernel(%arg0: i32, %arg1: memref<1x2048xi8, #tpu.memory_space<vmem>>, %arg2: memref<1x2048xf32, #tpu.memory_space<vmem>>) attributes {dimension_semantics = [#tpu.dimension_semantics<parallel>], iteration_bounds = array<i64: 1>, scalar_prefetch = 0 : i64, scratch_operands = 0 : i64, tpu.core_type = #tpu.core_type<tc>, window_params = [{transform_indices = @transform_0, window_bounds = array<i64: 1, 2048>}, {transform_indices = @transform_1, window_bounds = array<i64: 1, 2048>}]} {
    %c0 = arith.constant 0 : index
    %c0_0 = arith.constant 0 : index
    %0 = vector.load %arg1[%c0, %c0_0] : memref<1x2048xi8, #tpu.memory_space<vmem>>, vector<1x2048xi8>
    %1 = arith.uitofp %0 : vector<1x2048xi8> to vector<1x2048xf32>
    %cst = arith.constant 0.00392156886 : f32
    %2 = vector.broadcast %cst : f32 to vector<1x2048xf32>
    %3 = arith.mulf %1, %2 : vector<1x2048xf32>
    %c0_1 = arith.constant 0 : index
    %c0_2 = arith.constant 0 : index
    %4 = vector.load %arg2[%c0_1, %c0_2] : memref<1x2048xf32, #tpu.memory_space<vmem>>, vector<1x2048xf32>
    tpu.vector_store %arg2[%c0_1, %c0_2], %3 {strides = array<i32>} : memref<1x2048xf32, #tpu.memory_space<vmem>>, vector<1x2048xf32>,
    return
  }
  func.func @transform_0(%arg0: i32) -> (i32, i32) {
    %c0_i32 = arith.constant 0 : i32
    %c0_i32_0 = arith.constant 0 : i32
    return %arg0, %c0_i32 : i32, i32
  }
  func.func @transform_1(%arg0: i32) -> (i32, i32) {
    %c0_i32 = arith.constant 0 : i32
    %c0_i32_0 = arith.constant 0 : i32
    return %arg0, %c0_i32 : i32, i32
  }
}

</mosaic_0001>

<llo_original>
// kernel: tpu_custom_call.1
$region0: #{tpu_custom_call.1}
  #allocation0 [shape = 'u32[]', space=smem, size = 0x4, offset = 0x4, fixed_abs, tag = 'smem constant byte address 0x4 - core index']
  #allocation1 [shape = 'u32[144,128]{1,0:T(1,128)}', space=vmem, size = 0x12000, scoped, tag = 'internal scratch']
  %s0 = inlined_call_operand.hbm [shape: u8[1,2048], index: 0, kind: input, shape index: {}]
  %s1 = inlined_call_operand.hbm [shape: f32[1,2048], index: 1, kind: output, shape index: {}]
  %s2 = sld [smem:[#allocation0]]
  $region18: #{tpu_custom_call.1} parent=0
    _
  %s4 = ssub.s32 1, %s2
  %s5 = scalar_select 0, %s4, %s2
  $region1: #{tpu_custom_call.1} parent=0
    #allocation2 [shape = 'u8[8192]{0}', space=vmem, size = 0x2000, scoped, tag = 'input window, operand 0, single buffered']
    #allocation3 [shape = 's32[1]{0}', space=sflag, size = 0x4, scoped, tag = 'scoped memory for tpu_custom_call.1']
    #allocation4 [shape = 's32[1]{0}', space=sflag, size = 0x4, scoped, tag = 'scoped memory for tpu_custom_call.1']
    #allocation5 [shape = 'u8[8192]{0}', space=vmem, size = 0x2000, scoped, tag = 'output window, operand 0, single buffered']
    %6 = vsyncpa [#allocation3], 0
    %7 = vsyncpa [#allocation4], 0
    // Predicated region
    $region2: #{tpu_custom_call.1} parent=1 // pred_check
      _
    $region3: #{tpu_custom_call.1} parent=1 // pred_check_branch
      %9 = sbr.rel (0) target = $region5
    $region4: #{tpu_custom_call.1} parent=1 // pred_region
      %s11 = ssub.s32 256, 256
      %12 = vsyncadd [#allocation3], %s11
      %s14 = sshll.u32 [#allocation2], 4
      %s15 = int_to_ptr.vmem [resolvable:$true] %s14
      %17 = dma.hbm_to_vmem [thread:$0]  %s0, 256, %s15, [#allocation3]
    $region5: #{tpu_custom_call.1} parent=1 // pred_fallthru
      _
    // Predicated region
    $region6: #{tpu_custom_call.1} parent=1 // pred_check
      _
    $region7: #{tpu_custom_call.1} parent=1 // pred_check_branch
      %19 = sbr.rel (0) target = $region9
    $region8: #{tpu_custom_call.1} parent=1 // pred_region
      %20 = dma.done [#allocation3], 256
    $region9: #{tpu_custom_call.1} parent=1 // pred_fallthru
      _
    %v21 = vld [vmem:[#allocation2] sm:$0xff]
    %v22 = vld [vmem:[#allocation2 + $0x8] sm:$0xff]
    %v23 = vunpack.c.0.s8 %v21
    %v24 = vunpack.c.1.s8 %v21
    %v25 = vunpack.c.2.s8 %v21
    %v26 = vunpack.c.3.s8 %v21
    %v27 = vunpack.c.0.s8 %v22
    %v28 = vunpack.c.1.s8 %v22
    %v29 = vunpack.c.2.s8 %v22
    %v30 = vunpack.c.3.s8 %v22
    %v31 = vand.u32 %v23, 255
    %v32 = vand.u32 %v24, 255
    %v33 = vand.u32 %v25, 255
    %v34 = vand.u32 %v26, 255
    %v35 = vand.u32 %v27, 255
    %v36 = vand.u32 %v28, 255
    %v37 = vand.u32 %v29, 255
    %v38 = vand.u32 %v30, 255
    %v39 = vcvt.s32.f32 %v31
    %v40 = vcvt.s32.f32 %v32
    %v41 = vcvt.s32.f32 %v33
    %v42 = vcvt.s32.f32 %v34
    %v43 = vcvt.s32.f32 %v35
    %v44 = vcvt.s32.f32 %v36
    %v45 = vcvt.s32.f32 %v37
    %v46 = vcvt.s32.f32 %v38
    %v47 = vmul.f32 %v39, 0.003921569
    %v48 = vmul.f32 %v40, 0.003921569
    %v49 = vmul.f32 %v41, 0.003921569
    %v50 = vmul.f32 %v42, 0.003921569
    %v51 = vmul.f32 %v43, 0.003921569
    %v52 = vmul.f32 %v44, 0.003921569
    %v53 = vmul.f32 %v45, 0.003921569
    %v54 = vmul.f32 %v46, 0.003921569
    %v64 = vunpack.c.l.s4 1966171168
    %v65 = vunpack.c.0.s8 %v64
    %v66 = vlaneseq
    %v67 = vshrl.u32 %v66, 7
    %v68 = vsub.s32 %v65, %v67
    %v69 = vrot.slane %v47, %v68
    %v71 = vunpack.c.l.s4 1966171168
    %v72 = vunpack.c.0.s8 %v71
    %v73 = vlaneseq
    %v74 = vshrl.u32 %v73, 7
    %v75 = vsub.s32 %v72, %v74
    %v76 = vrot.slane %v48, %v75
    %v78 = vunpack.c.l.s4 1966171168
    %v79 = vunpack.c.0.s8 %v78
    %v80 = vlaneseq
    %v81 = vshrl.u32 %v80, 7
    %v82 = vsub.s32 %v79, %v81
    %v83 = vrot.slane %v49, %v82
    %v85 = vunpack.c.l.s4 1966171168
    %v86 = vunpack.c.0.s8 %v85
    %v87 = vlaneseq
    %v88 = vshrl.u32 %v87, 7
    %v89 = vsub.s32 %v86, %v88
    %v90 = vrot.slane %v50, %v89
    %v91 = vcombine.low %v69, %v76
    %v92 = vcombine.low %v83, %v90
    %v94 = vunpack.c.l.s4 1966171168
    %v95 = vunpack.c.0.s8 %v94
    %v96 = vlaneseq
    %v97 = vshrl.u32 %v96, 7
    %v98 = vsub.s32 %v95, %v97
    %v99 = vrot.slane %v91, %v98
    %v101 = vunpack.c.l.s4 1966171168
    %v102 = vunpack.c.0.s8 %v101
    %v103 = vlaneseq
    %v104 = vshrl.u32 %v103, 7
    %v105 = vsub.s32 %v102, %v104
    %v106 = vrot.slane %v92, %v105
    %v107 = vcombine.low %v99, %v106
    %v109 = vunpack.c.l.s4 1966171168
    %v110 = vunpack.c.0.s8 %v109
    %v111 = vlaneseq
    %v112 = vshrl.u32 %v111, 7
    %v113 = vsub.s32 %v110, %v112
    %v114 = vrot.slane %v51, %v113
    %v116 = vunpack.c.l.s4 1966171168
    %v117 = vunpack.c.0.s8 %v116
    %v118 = vlaneseq
    %v119 = vshrl.u32 %v118, 7
    %v120 = vsub.s32 %v117, %v119
    %v121 = vrot.slane %v52, %v120
    %v123 = vunpack.c.l.s4 1966171168
    %v124 = vunpack.c.0.s8 %v123
    %v125 = vlaneseq
    %v126 = vshrl.u32 %v125, 7
    %v127 = vsub.s32 %v124, %v126
    %v128 = vrot.slane %v53, %v127
    %v130 = vunpack.c.l.s4 1966171168
    %v131 = vunpack.c.0.s8 %v130
    %v132 = vlaneseq
    %v133 = vshrl.u32 %v132, 7
    %v134 = vsub.s32 %v131, %v133
    %v135 = vrot.slane %v54, %v134
    %v136 = vcombine.low %v114, %v121
    %v137 = vcombine.low %v128, %v135
    %v139 = vunpack.c.l.s4 1966171168
    %v140 = vunpack.c.0.s8 %v139
    %v141 = vlaneseq
    %v142 = vshrl.u32 %v141, 7
    %v143 = vsub.s32 %v140, %v142
    %v144 = vrot.slane %v136, %v143
    %v146 = vunpack.c.l.s4 1966171168
    %v147 = vunpack.c.0.s8 %v146
    %v148 = vlaneseq
    %v149 = vshrl.u32 %v148, 7
    %v150 = vsub.s32 %v147, %v149
    %v151 = vrot.slane %v137, %v150
    %v152 = vcombine.low %v144, %v151
    %155 = vst [vmem:[#allocation5] sm:$0xff] %v107
    %156 = vst [vmem:[#allocation5 + $0x8] sm:$0xff] %v152
    // Predicated region
    $region10: #{tpu_custom_call.1} parent=1 // pred_check
      _
    $region11: #{tpu_custom_call.1} parent=1 // pred_check_branch
      %158 = sbr.rel (0) target = $region13
    $region12: #{tpu_custom_call.1} parent=1 // pred_region
      %s160 = ssub.s32 256, 256
      %161 = vsyncadd [#allocation4], %s160
      %s163 = sshll.u32 [#allocation5], 4
      %s164 = int_to_ptr.vmem [resolvable:$true] %s163
      %166 = dma.vmem_to_hbm [thread:$0]  %s164, 256, %s1, [#allocation4]
    $region13: #{tpu_custom_call.1} parent=1 // pred_fallthru
      _
    // Predicated region
    $region14: #{tpu_custom_call.1} parent=1 // pred_check
      _
    $region15: #{tpu_custom_call.1} parent=1 // pred_check_branch
      %168 = sbr.rel (0) target = $region17
    $region16: #{tpu_custom_call.1} parent=1 // pred_region
      %169 = dma.done [#allocation4], 256
    $region17: #{tpu_custom_call.1} parent=1 // pred_fallthru
      _
    %170 = vsyncpa [#allocation3], 1
    %171 = vsyncpa [#allocation4], 1

</llo_original>
